<compile_context>
chip_gen: v6e
topology: v6e:2x2x1
jax: 0.10.0
libtpu: 0.0.40
codegen_flags: <defaults>
</compile_context>

<pallas_src>
import functools

import jax
import jax.numpy as jnp
from jax.experimental import pallas as pl
from jax.experimental.pallas import tpu as pltpu

_LANE = 128     # vreg lane width
_SUBLANE = 8    # vreg sublane depth (f32)


def _round_up(x: int, m: int) -> int:
    return ((x + m - 1) // m) * m


@functools.lru_cache(maxsize=1)
def _is_v5e() -> bool:
    try:
        kind = jax.devices()[0].device_kind.lower()
        return ("v5 lite" in kind) or ("v5e" in kind) or ("v5litepod" in kind)
    except Exception:
        return False


@functools.lru_cache(maxsize=1)
def _vmem_capacity_bytes() -> int:
    try:
        return int(pltpu.get_tpu_info().vmem_capacity_bytes)
    except Exception:
        return 64 << 20     # conservative (v7x per-TC VMEM)


def _pad_feature(d: int) -> int:
    """Lane-dense feature padding.

    v6e/v7x MXUs are 2x256x256: once the true dim is already >= 128, pad to a
    256 multiple to fill full MXU panels; otherwise a single 128-lane panel.
    """
    if d >= _LANE and not _is_v5e():
        return _round_up(d, 2 * _LANE)
    return _round_up(d, _LANE)


def _const_block_spec(shape):
    """Whole-array block with a constant index_map (weights / biases).

    Single-buffered: the block is identical for every grid step, so default
    double-buffering would only double its VMEM footprint with zero overlap
    benefit.  Falls back to the default spec on older jax versions.
    """
    try:
        return pl.BlockSpec(shape, lambda i: (0, 0), pipeline_mode=pl.Buffered(1))
    except Exception:
        return pl.BlockSpec(shape, lambda i: (0, 0))


def _fused_mlp_kernel(*refs, num_layers: int):
    """refs = (x_ref, w0_ref, b0_ref, w1_ref, b1_ref, ..., o_ref).

    The whole (padded) layer stack runs in one kernel invocation; intermediate
    activations never leave VMEM/vregs.  Matmul inputs are bf16 (MXU-native on
    v6e/v7x); accumulation, bias-add and ReLU stay in f32.  Zero-padded
    feature columns stay exactly zero through bias/ReLU/next matmul, so the
    padding is numerically inert.
    """
    x_ref = refs[0]
    o_ref = refs[-1]
    h = x_ref[...]                                       # bf16 input tile
    for l in range(num_layers):
        w_ref = refs[1 + 2 * l]
        b_ref = refs[2 + 2 * l]
        y = jnp.dot(h, w_ref[...], preferred_element_type=jnp.float32)
        y = y + b_ref[...]                               # f32 bias, (1, Np) bcast
        if l < num_layers - 1:                           # final layer: no act
            y = jnp.maximum(y, 0.0)                      # f32 ReLU
            h = y.astype(jnp.bfloat16)                   # next MXU input
        else:
            h = y
    o_ref[...] = h.astype(o_ref.dtype)


def prepare_params(params, compute_dtype=jnp.bfloat16):
    """Pad feature dims once (lane-dense) and cast weights for the MXU.

    params: list of (W, b), W shaped (in, out)  (== PyTorch weight.T).
    Done once so every forward call skips the per-call jnp.pad of the whole
    weight stack (pure HBM bandwidth waste otherwise).
    """
    output_size = params[-1][0].shape[1]
    layers = []
    for (w, b) in params:
        k_in, k_out = w.shape
        kp, npad = _pad_feature(k_in), _pad_feature(k_out)
        w_p = jnp.pad(w, ((0, kp - k_in), (0, npad - k_out))).astype(compute_dtype)
        b_p = jnp.pad(b, ((0, npad - k_out),)).astype(jnp.float32).reshape(1, npad)
        layers.append((w_p, b_p))
    meta = {"output_size": output_size}
    return layers, meta


def _choose_tm(M: int, kp_in: int, np_out: int, widest: int) -> int:
    """Largest row tile that fits the per-step activation budget.

    Keeps >= 2 grid steps when the batch allows it so the 'parallel' grid axis
    actually splits across both v7x TensorCores (no-op on v5e/v6e).
    """
    cap = 128 if _is_v5e() else 512          # v5e: 128x128 MXU, 1 vst slot
    tm = min(_round_up(M, _SUBLANE), cap)
    if M >= 2 * _SUBLANE:                    # allow >= 2 grid steps
        tm = min(tm, _round_up(pl.cdiv(M, 2), _SUBLANE))

    act_budget = 16 << 20 if _is_v5e() else 24 << 20

    def footprint(t):
        io = 2 * t * kp_in * 2 + 2 * t * np_out * 4   # double-buffered x / out
        live = 2 * t * widest * 4                     # widest f32 intermediate (+bf16 copy)
        return io + live

    while tm > _SUBLANE and footprint(tm) > act_budget:
        tm //= 2
    return max(_round_up(tm, _SUBLANE), _SUBLANE)


def _vmem_limit_bytes(weight_bytes: int, tm: int, kp_in: int,
                      np_out: int, widest: int) -> int:
    needed = (weight_bytes                    # single-buffered weights + biases
              + 2 * tm * kp_in * 2            # x block (bf16, double-buffered)
              + 2 * tm * np_out * 4           # out block (f32, double-buffered)
              + 2 * tm * widest * 4)          # widest live f32 intermediate
    cap = _vmem_capacity_bytes()
    return int(min(max(2 * needed, 32 << 20), (cap * 3) // 4))


@functools.partial(jax.jit, static_argnames=("output_size",))
def _deep_mlp_forward_padded(layers, x, *, output_size):
    M, K = x.shape
    num_layers = len(layers)
    kp_in = layers[0][0].shape[0]
    np_out = layers[-1][0].shape[1]
    widest = max(max(w.shape) for (w, _) in layers)
    weight_bytes = sum(w.size * w.dtype.itemsize + b.size * b.dtype.itemsize
                       for (w, b) in layers)

    tm = _choose_tm(M, kp_in, np_out, widest)
    m_pad = _round_up(M, tm)

    # Pad batch rows (sublane rule) + feature cols; bf16 for the MXU.
    x_p = jnp.pad(x, ((0, m_pad - M), (0, kp_in - K))).astype(jnp.bfloat16)

    in_specs = [pl.BlockSpec((tm, kp_in), lambda i: (i, 0))]
    operands = [x_p]
    for (w_p, b_p) in layers:
        in_specs.append(_const_block_spec(w_p.shape))
        in_specs.append(_const_block_spec(b_p.shape))
        operands.append(w_p)
        operands.append(b_p)

    kernel = functools.partial(_fused_mlp_kernel, num_layers=num_layers)
    out_p = pl.pallas_call(
        kernel,
        out_shape=jax.ShapeDtypeStruct((m_pad, np_out), x.dtype),
        grid=(m_pad // tm,),
        in_specs=in_specs,
        out_specs=pl.BlockSpec((tm, np_out), lambda i: (i, 0)),
        compiler_params=pltpu.CompilerParams(
            dimension_semantics=("parallel",),
            vmem_limit_bytes=_vmem_limit_bytes(weight_bytes, tm, kp_in,
                                               np_out, widest)),
    )(*operands)

    # Strip row / column padding (cheap XLA slice).
    return out_p[:M, :output_size]


def deep_mlp_forward(prepared, x):
    """Fused forward identical to DeepMLP: (Linear+ReLU)* then Linear."""
    layers, meta = prepared
    return _deep_mlp_forward_padded(layers, x, output_size=meta["output_size"])


def init_deep_mlp_params(key, input_size, hidden_layer_sizes, output_size,
                         dtype=jnp.float32):
    """Deterministic init mirroring nn.Linear's default U(-1/sqrt(fan_in), ...)."""
    sizes = [input_size] + list(hidden_layer_sizes) + [output_size]
    params = []
    for fan_in, fan_out in zip(sizes[:-1], sizes[1:]):
        key, kw, kb = jax.random.split(key, 3)
        bound = 1.0 / jnp.sqrt(jnp.array(fan_in, dtype))
        # stored as (in, out) so the kernel does x @ W
        W = jax.random.uniform(kw, (fan_in, fan_out), dtype, -bound, bound)
        b = jax.random.uniform(kb, (fan_out,), dtype, -bound, bound)
        params.append((W, b))
    return params


if __name__ == "__main__":
    key = jax.random.PRNGKey(0)

    # Small shapes implied by the module: flat feature vectors in, logits out.
    batch = 16
    input_size = 32
    hidden_layer_sizes = [64, 32]
    output_size = 8

    key, kx = jax.random.split(key)
    x = jax.random.normal(kx, (batch, input_size), jnp.float32)

    params = init_deep_mlp_params(key, input_size, hidden_layer_sizes, output_size)
    prepared = prepare_params(params)          # pad + cast weights ONCE

    out = deep_mlp_forward(prepared, x)
    out = jax.block_until_ready(out)

    # Cross-check against a pure-JAX f32 reference of the same computation.
    ref = x
    for i, (W, b) in enumerate(params):
        ref = ref @ W + b
        if i < len(params) - 1:
            ref = jnp.maximum(ref, 0.0)

    assert out.shape == (batch, output_size)
    # bf16 matmul inputs / f32 accumulation -> loosened tolerance.
    assert jnp.allclose(out, ref, atol=2e-2, rtol=2e-2), float(
        jnp.max(jnp.abs(out - ref)))

    print("KERNEL_OK")
</pallas_src>

<mosaic_0001>
module attributes {stable_mosaic.version = 11 : i64} {
  func.func @_fused_mlp_kernel(%arg0: i32, %arg1: memref<8x128xbf16, #tpu.memory_space<vmem>>, %arg2: memref<128x128xbf16, #tpu.memory_space<vmem>>, %arg3: memref<1x128xf32, #tpu.memory_space<vmem>>, %arg4: memref<128x128xbf16, #tpu.memory_space<vmem>>, %arg5: memref<1x128xf32, #tpu.memory_space<vmem>>, %arg6: memref<128x128xbf16, #tpu.memory_space<vmem>>, %arg7: memref<1x128xf32, #tpu.memory_space<vmem>>, %arg8: memref<8x128xf32, #tpu.memory_space<vmem>>) attributes {dimension_semantics = [#tpu.dimension_semantics<parallel>], iteration_bounds = array<i64: 2>, scalar_prefetch = 0 : i64, scratch_operands = 0 : i64, tpu.core_type = #tpu.core_type<tc>, window_params = [{transform_indices = @transform_0, window_bounds = array<i64: 8, 128>}, {pipeline_mode = #tpu.pipeline_mode<synchronous>, transform_indices = @transform_1, window_bounds = array<i64: 128, 128>}, {pipeline_mode = #tpu.pipeline_mode<synchronous>, transform_indices = @transform_2, window_bounds = array<i64: 1, 128>}, {pipeline_mode = #tpu.pipeline_mode<synchronous>, transform_indices = @transform_3, window_bounds = array<i64: 128, 128>}, {pipeline_mode = #tpu.pipeline_mode<synchronous>, transform_indices = @transform_4, window_bounds = array<i64: 1, 128>}, {pipeline_mode = #tpu.pipeline_mode<synchronous>, transform_indices = @transform_5, window_bounds = array<i64: 128, 128>}, {pipeline_mode = #tpu.pipeline_mode<synchronous>, transform_indices = @transform_6, window_bounds = array<i64: 1, 128>}, {transform_indices = @transform_7, window_bounds = array<i64: 8, 128>}]} {
    %c0 = arith.constant 0 : index
    %c0_0 = arith.constant 0 : index
    %0 = vector.load %arg1[%c0, %c0_0] : memref<8x128xbf16, #tpu.memory_space<vmem>>, vector<8x128xbf16>
    %c0_1 = arith.constant 0 : index
    %c0_2 = arith.constant 0 : index
    %1 = vector.load %arg2[%c0_1, %c0_2] : memref<128x128xbf16, #tpu.memory_space<vmem>>, vector<128x128xbf16>
    %cst = arith.constant dense<0.000000e+00> : vector<8x128xf32>
    %2 = tpu.matmul %0, %1, %cst {dimension_numbers = #tpu.dot_dimension_numbers<[1], [0], [0], [1], [0, 0, 1, 1], [], []>} : vector<8x128xbf16>, vector<128x128xbf16>, vector<8x128xf32> -> vector<8x128xf32>
    %c0_3 = arith.constant 0 : index
    %c0_4 = arith.constant 0 : index
    %3 = vector.load %arg3[%c0_3, %c0_4] : memref<1x128xf32, #tpu.memory_space<vmem>>, vector<1x128xf32>
    %4 = vector.broadcast %3 : vector<1x128xf32> to vector<8x128xf32>
    %5 = arith.addf %2, %4 : vector<8x128xf32>
    %cst_5 = arith.constant 0.000000e+00 : f32
    %6 = vector.broadcast %cst_5 : f32 to vector<8x128xf32>
    %7 = arith.maximumf %5, %6 : vector<8x128xf32>
    %8 = arith.truncf %7 : vector<8x128xf32> to vector<8x128xbf16>
    %c0_6 = arith.constant 0 : index
    %c0_7 = arith.constant 0 : index
    %9 = vector.load %arg4[%c0_6, %c0_7] : memref<128x128xbf16, #tpu.memory_space<vmem>>, vector<128x128xbf16>
    %cst_8 = arith.constant dense<0.000000e+00> : vector<8x128xf32>
    %10 = tpu.matmul %8, %9, %cst_8 {dimension_numbers = #tpu.dot_dimension_numbers<[1], [0], [0], [1], [0, 0, 1, 1], [], []>} : vector<8x128xbf16>, vector<128x128xbf16>, vector<8x128xf32> -> vector<8x128xf32>
    %c0_9 = arith.constant 0 : index
    %c0_10 = arith.constant 0 : index
    %11 = vector.load %arg5[%c0_9, %c0_10] : memref<1x128xf32, #tpu.memory_space<vmem>>, vector<1x128xf32>
    %12 = vector.broadcast %11 : vector<1x128xf32> to vector<8x128xf32>
    %13 = arith.addf %10, %12 : vector<8x128xf32>
    %cst_11 = arith.constant 0.000000e+00 : f32
    %14 = vector.broadcast %cst_11 : f32 to vector<8x128xf32>
    %15 = arith.maximumf %13, %14 : vector<8x128xf32>
    %16 = arith.truncf %15 : vector<8x128xf32> to vector<8x128xbf16>
    %c0_12 = arith.constant 0 : index
    %c0_13 = arith.constant 0 : index
    %17 = vector.load %arg6[%c0_12, %c0_13] : memref<128x128xbf16, #tpu.memory_space<vmem>>, vector<128x128xbf16>
    %cst_14 = arith.constant dense<0.000000e+00> : vector<8x128xf32>
    %18 = tpu.matmul %16, %17, %cst_14 {dimension_numbers = #tpu.dot_dimension_numbers<[1], [0], [0], [1], [0, 0, 1, 1], [], []>} : vector<8x128xbf16>, vector<128x128xbf16>, vector<8x128xf32> -> vector<8x128xf32>
    %c0_15 = arith.constant 0 : index
    %c0_16 = arith.constant 0 : index
    %19 = vector.load %arg7[%c0_15, %c0_16] : memref<1x128xf32, #tpu.memory_space<vmem>>, vector<1x128xf32>
    %20 = vector.broadcast %19 : vector<1x128xf32> to vector<8x128xf32>
    %21 = arith.addf %18, %20 : vector<8x128xf32>
    %c0_17 = arith.constant 0 : index
    %c0_18 = arith.constant 0 : index
    %22 = vector.load %arg8[%c0_17, %c0_18] : memref<8x128xf32, #tpu.memory_space<vmem>>, vector<8x128xf32>
    tpu.vector_store %arg8[%c0_17, %c0_18], %21 {strides = array<i32>} : memref<8x128xf32, #tpu.memory_space<vmem>>, vector<8x128xf32>,
    return
  }
  func.func @transform_0(%arg0: i32) -> (i32, i32) {
    %c0_i32 = arith.constant 0 : i32
    %c0_i32_0 = arith.constant 0 : i32
    return %arg0, %c0_i32 : i32, i32
  }
  func.func @transform_1(%arg0: i32) -> (i32, i32) {
    %c0_i32 = arith.constant 0 : i32
    %c0_i32_0 = arith.constant 0 : i32
    %c0_i32_1 = arith.constant 0 : i32
    return %c0_i32, %c0_i32_0 : i32, i32
  }
  func.func @transform_2(%arg0: i32) -> (i32, i32) {
    %c0_i32 = arith.constant 0 : i32
    %c0_i32_0 = arith.constant 0 : i32
    %c0_i32_1 = arith.constant 0 : i32
    return %c0_i32, %c0_i32_0 : i32, i32
  }
  func.func @transform_3(%arg0: i32) -> (i32, i32) {
    %c0_i32 = arith.constant 0 : i32
    %c0_i32_0 = arith.constant 0 : i32
    %c0_i32_1 = arith.constant 0 : i32
    return %c0_i32, %c0_i32_0 : i32, i32
  }
  func.func @transform_4(%arg0: i32) -> (i32, i32) {
    %c0_i32 = arith.constant 0 : i32
    %c0_i32_0 = arith.constant 0 : i32
    %c0_i32_1 = arith.constant 0 : i32
    return %c0_i32, %c0_i32_0 : i32, i32
  }
  func.func @transform_5(%arg0: i32) -> (i32, i32) {
    %c0_i32 = arith.constant 0 : i32
    %c0_i32_0 = arith.constant 0 : i32
    %c0_i32_1 = arith.constant 0 : i32
    return %c0_i32, %c0_i32_0 : i32, i32
  }
  func.func @transform_6(%arg0: i32) -> (i32, i32) {
    %c0_i32 = arith.constant 0 : i32
    %c0_i32_0 = arith.constant 0 : i32
    %c0_i32_1 = arith.constant 0 : i32
    return %c0_i32, %c0_i32_0 : i32, i32
  }
  func.func @transform_7(%arg0: i32) -> (i32, i32) {
    %c0_i32 = arith.constant 0 : i32
    %c0_i32_0 = arith.constant 0 : i32
    return %arg0, %c0_i32 : i32, i32
  }
}

</mosaic_0001>

<llo_original>
// kernel: _deep_mlp_forward_padded.1
$region0: #{_deep_mlp_forward_padded.1}
  #allocation0 [shape = 'u32[]', space=smem, size = 0x4, offset = 0x4, fixed_abs, tag = 'smem constant byte address 0x4 - core index']
  #allocation1 [shape = 'u32[144,128]{1,0:T(1,128)}', space=vmem, size = 0x12000, scoped, tag = 'internal scratch']
  %s0 = inlined_call_operand.vmem [shape: bf16[16,128], index: 0, kind: input, shape index: {}]
  %s1 = inlined_call_operand.hbm [shape: bf16[128,128], index: 1, kind: input, shape index: {}]
  %s2 = inlined_call_operand.vmem [shape: f32[1,128], index: 2, kind: input, shape index: {}]
  %s3 = inlined_call_operand.hbm [shape: bf16[128,128], index: 3, kind: input, shape index: {}]
  %s4 = inlined_call_operand.vmem [shape: f32[1,128], index: 4, kind: input, shape index: {}]
  %s5 = inlined_call_operand.hbm [shape: bf16[128,128], index: 5, kind: input, shape index: {}]
  %s6 = inlined_call_operand.vmem [shape: f32[1,128], index: 6, kind: input, shape index: {}]
  %s7 = inlined_call_operand.vmem [shape: f32[16,128], index: 7, kind: output, shape index: {}]
  %s8 = sld [smem:[#allocation0]]
  $region73: #{_deep_mlp_forward_padded.1} parent=0
    _
  %s10 = ssub.s32 1, %s8
  %s11 = scalar_select 0, %s10, %s8
  $region1: #{_deep_mlp_forward_padded.1} parent=0
    #allocation2 [shape = 'u8[32768]{0}', space=vmem, size = 0x8000, scoped, tag = 'input window, operand 1, single buffered']
    #allocation3 [shape = 's32[2]{0}', space=sflag, size = 0x8, scoped, tag = 'scoped memory for _deep_mlp_forward_padded.1']
    #allocation4 [shape = 'u8[32768]{0}', space=vmem, size = 0x8000, scoped, tag = 'input window, operand 3, single buffered']
    #allocation5 [shape = 's32[1]{0}', space=sflag, size = 0x4, scoped, tag = 'scoped memory for _deep_mlp_forward_padded.1']
    #allocation6 [shape = 'u8[32768]{0}', space=vmem, size = 0x8000, scoped, tag = 'input window, operand 5, single buffered']
    %12 = vsyncpa [#allocation3], 0
    %13 = vsyncpa [#allocation5], 0
    loop: start=0, step=1, limit=4
    $region2: #{_deep_mlp_forward_padded.1} parent=1 // loop_pre_header
      _
    $region3: #{_deep_mlp_forward_padded.1} parent=1 // loop_header
      %s15 = sphi 0, %s19
      %p16 = scmp.ge.s32.totalorder %s15, 4
      %s25 = sphi 0, %s27
      %s28 = sphi 0, %s25
      %s29 = sphi 0, %s28
      %s45 = sphi 0, %s29
      %s49 = sphi 0, %s49
      %s51 = sphi 0, %s49
      %s52 = sphi 0, %s51
      %s66 = sphi 0, %s52
      %s70 = sphi 0, %s70
      %s72 = sphi 0, %s70
      %s73 = sphi 0, %s72
      %s87 = sphi 0, %s73
      %s91 = sphi 0, %s91
      %s93 = sphi 0, %s91
      %s94 = sphi 0, %s93
      %s108 = sphi 0, %s94
      %s112 = sphi 0, %s112
      %s114 = sphi 0, %s112
      %s115 = sphi 0, %s114
      %s129 = sphi 0, %s115
      %s133 = sphi 0, %s133
      %s135 = sphi 0, %s133
      %s136 = sphi 0, %s135
      %s150 = sphi 0, %s136
      %s154 = sphi 0, %s154
      %s156 = sphi 0, %s154
      %s157 = sphi 0, %s156
      %s171 = sphi 0, %s157
      %s177 = sphi 0, %s179
      %s180 = sphi 0, %s177
      %s181 = sphi 0, %s180
      %s197 = sphi 0, %s181
    $region4: #{_deep_mlp_forward_padded.1} parent=1 // loop_header_branch
      %18 = sbr.rel (%p16) target = $region8
    $region5: #{_deep_mlp_forward_padded.1} parent=1 // loop_body
      %s20 = ssub.s32 %s15, 1
      %s21 = ssub.s32 %s15, 2
      %s22 = sadd.s32 %s15, 1
      %s23 = ssub.s32 %s15, %s22
      %p24 = scmp.eq.s32.totalorder %s23, 0
      %s26 = sadd.s32 %s25, 1
      %s27 = scalar_select %p24, %s25, %s26
      %p30 = pneg %p24
      %p31 = scmp.eq.s32.totalorder %s15, 1
      %p32 = por %p30, %p31
      %p33 = scmp.ne.s32.totalorder %s25, %s28
      %p34 = scmp.eq.s32.totalorder %s15, 0
      %p35 = por %p33, %p34
      %p36 = scmp.ne.s32.totalorder %s25, %s28
      %p37 = scmp.eq.s32.totalorder %s20, 1
      %p38 = por %p36, %p37
      %p39 = scmp.ne.s32.totalorder %s28, %s29
      %p40 = scmp.eq.s32.totalorder %s20, 0
      %p41 = por %p39, %p40
      %p42 = scmp.ne.s32.totalorder %s28, %s29
      %p43 = scmp.eq.s32.totalorder %s21, 1
      %p44 = por %p42, %p43
      %p46 = scmp.ne.s32.totalorder %s29, %s45
      %p47 = scmp.eq.s32.totalorder %s21, 0
      %p48 = por %p46, %p47
      %s50 = sadd.s32 %s49, 1
      %p53 = scmp.eq.s32.totalorder %s15, 1
      %p54 = scmp.ne.s32.totalorder %s49, %s51
      %p55 = scmp.eq.s32.totalorder %s15, 0
      %p56 = por %p54, %p55
      %p57 = scmp.ne.s32.totalorder %s49, %s51
      %p58 = scmp.eq.s32.totalorder %s20, 1
      %p59 = por %p57, %p58
      %p60 = scmp.ne.s32.totalorder %s51, %s52
      %p61 = scmp.eq.s32.totalorder %s20, 0
      %p62 = por %p60, %p61
      %p63 = scmp.ne.s32.totalorder %s51, %s52
      %p64 = scmp.eq.s32.totalorder %s21, 1
      %p65 = por %p63, %p64
      %p67 = scmp.ne.s32.totalorder %s52, %s66
      %p68 = scmp.eq.s32.totalorder %s21, 0
      %p69 = por %p67, %p68
      %s71 = sadd.s32 %s70, 1
      %p74 = scmp.eq.s32.totalorder %s15, 1
      %p75 = scmp.ne.s32.totalorder %s70, %s72
      %p76 = scmp.eq.s32.totalorder %s15, 0
      %p77 = por %p75, %p76
      %p78 = scmp.ne.s32.totalorder %s70, %s72
      %p79 = scmp.eq.s32.totalorder %s20, 1
      %p80 = por %p78, %p79
      %p81 = scmp.ne.s32.totalorder %s72, %s73
      %p82 = scmp.eq.s32.totalorder %s20, 0
      %p83 = por %p81, %p82
      %p84 = scmp.ne.s32.totalorder %s72, %s73
      %p85 = scmp.eq.s32.totalorder %s21, 1
      %p86 = por %p84, %p85
      %p88 = scmp.ne.s32.totalorder %s73, %s87
      %p89 = scmp.eq.s32.totalorder %s21, 0
      %p90 = por %p88, %p89
      %s92 = sadd.s32 %s91, 1
      %p95 = scmp.eq.s32.totalorder %s15, 1
      %p96 = scmp.ne.s32.totalorder %s91, %s93
      %p97 = scmp.eq.s32.totalorder %s15, 0
      %p98 = por %p96, %p97
      %p99 = scmp.ne.s32.totalorder %s91, %s93
      %p100 = scmp.eq.s32.totalorder %s20, 1
      %p101 = por %p99, %p100
      %p102 = scmp.ne.s32.totalorder %s93, %s94
      %p103 = scmp.eq.s32.totalorder %s20, 0
      %p104 = por %p102, %p103
      %p105 = scmp.ne.s32.totalorder %s93, %s94
      %p106 = scmp.eq.s32.totalorder %s21, 1
      %p107 = por %p105, %p106
      %p109 = scmp.ne.s32.totalorder %s94, %s108
      %p110 = scmp.eq.s32.totalorder %s21, 0
      %p111 = por %p109, %p110
      %s113 = sadd.s32 %s112, 1
      %p116 = scmp.eq.s32.totalorder %s15, 1
      %p117 = scmp.ne.s32.totalorder %s112, %s114
      %p118 = scmp.eq.s32.totalorder %s15, 0
      %p119 = por %p117, %p118
      %p120 = scmp.ne.s32.totalorder %s112, %s114
      %p121 = scmp.eq.s32.totalorder %s20, 1
      %p122 = por %p120, %p121
      %p123 = scmp.ne.s32.totalorder %s114, %s115
      %p124 = scmp.eq.s32.totalorder %s20, 0
      %p125 = por %p123, %p124
      %p126 = scmp.ne.s32.totalorder %s114, %s115
      %p127 = scmp.eq.s32.totalorder %s21, 1
      %p128 = por %p126, %p127
      %p130 = scmp.ne.s32.totalorder %s115, %s129
      %p131 = scmp.eq.s32.totalorder %s21, 0
      %p132 = por %p130, %p131
      %s134 = sadd.s32 %s133, 1
      %p137 = scmp.eq.s32.totalorder %s15, 1
      %p138 = scmp.ne.s32.totalorder %s133, %s135
      %p139 = scmp.eq.s32.totalorder %s15, 0
      %p140 = por %p138, %p139
      %p141 = scmp.ne.s32.totalorder %s133, %s135
      %p142 = scmp.eq.s32.totalorder %s20, 1
      %p143 = por %p141, %p142
      %p144 = scmp.ne.s32.totalorder %s135, %s136
      %p145 = scmp.eq.s32.totalorder %s20, 0
      %p146 = por %p144, %p145
      %p147 = scmp.ne.s32.totalorder %s135, %s136
      %p148 = scmp.eq.s32.totalorder %s21, 1
      %p149 = por %p147, %p148
      %p151 = scmp.ne.s32.totalorder %s136, %s150
      %p152 = scmp.eq.s32.totalorder %s21, 0
      %p153 = por %p151, %p152
      %s155 = sadd.s32 %s154, 1
      %p158 = scmp.eq.s32.totalorder %s15, 1
      %p159 = scmp.ne.s32.totalorder %s154, %s156
      %p160 = scmp.eq.s32.totalorder %s15, 0
      %p161 = por %p159, %p160
      %p162 = scmp.ne.s32.totalorder %s154, %s156
      %p163 = scmp.eq.s32.totalorder %s20, 1
      %p164 = por %p162, %p163
      %p165 = scmp.ne.s32.totalorder %s156, %s157
      %p166 = scmp.eq.s32.totalorder %s20, 0
      %p167 = por %p165, %p166
      %p168 = scmp.ne.s32.totalorder %s156, %s157
      %p169 = scmp.eq.s32.totalorder %s21, 1
      %p170 = por %p168, %p169
      %p172 = scmp.ne.s32.totalorder %s157, %s171
      %p173 = scmp.eq.s32.totalorder %s21, 0
      %p174 = por %p172, %p173
      %s175 = ssub.s32 %s15, %s22
      %p176 = scmp.eq.s32.totalorder %s175, 0
      %s178 = sadd.s32 %s177, 1
      %s179 = scalar_select %p176, %s177, %s178
      %p182 = pneg %p176
      %p183 = scmp.eq.s32.totalorder %s15, 1
      %p184 = por %p182, %p183
      %p185 = scmp.ne.s32.totalorder %s177, %s180
      %p186 = scmp.eq.s32.totalorder %s15, 0
      %p187 = por %p185, %p186
      %p188 = scmp.ne.s32.totalorder %s177, %s180
      %p189 = scmp.eq.s32.totalorder %s20, 1
      %p190 = por %p188, %p189
      %p191 = scmp.ne.s32.totalorder %s180, %s181
      %p192 = scmp.eq.s32.totalorder %s20, 0
      %p193 = por %p191, %p192
      %p194 = scmp.ne.s32.totalorder %s180, %s181
      %p195 = scmp.eq.s32.totalorder %s21, 1
      %p196 = por %p194, %p195
      %p198 = scmp.ne.s32.totalorder %s181, %s197
      %p199 = scmp.eq.s32.totalorder %s21, 0
      %p200 = por %p198, %p199
      %p201 = scmp.le.s32.totalorder 1, %s15
      %p202 = scmp.lt.s32.totalorder %s15, 3
      %p203 = pnand %p201, %p202
      %p204 = pneg %p203
      // Predicated region
      $region9: #{_deep_mlp_forward_padded.1} parent=5 // pred_check
        _
      $region10: #{_deep_mlp_forward_padded.1} parent=5 // pred_check_branch
        %206 = sbr.rel (%p203) target = $region12
      $region11: #{_deep_mlp_forward_padded.1} parent=5 // pred_region
        %s207 = ssub.s32 %s15, 1
        // Predicated region
        $region13: #{_deep_mlp_forward_padded.1} parent=11 // pred_check
          %p208 = pneg %p62
        $region14: #{_deep_mlp_forward_padded.1} parent=11 // pred_check_branch
          %210 = sbr.rel (%p208) target = $region16
        $region15: #{_deep_mlp_forward_padded.1} parent=11 // pred_region
          %s212 = ssub.s32 1024, 1024
          %213 = vsyncadd [#allocation3], %s212
          %s214 = sshll.u32 [#allocation2], 4
          %s215 = int_to_ptr.vmem [resolvable:$true] %s214
          %220 = dma.hbm_to_vmem [thread:$0]  %s1, 1024, %s215, [#allocation3], 64, 64, 4
        $region16: #{_deep_mlp_forward_padded.1} parent=11 // pred_fallthru
          _
        // Predicated region
        $region17: #{_deep_mlp_forward_padded.1} parent=11 // pred_check
          %p221 = pneg %p83
        $region18: #{_deep_mlp_forward_padded.1} parent=11 // pred_check_branch
          %223 = sbr.rel (%p221) target = $region20
        $region19: #{_deep_mlp_forward_padded.1} parent=11 // pred_region
          _
        $region20: #{_deep_mlp_forward_padded.1} parent=11 // pred_fallthru
          _
        // Predicated region
        $region21: #{_deep_mlp_forward_padded.1} parent=11 // pred_check
          %p224 = pneg %p104
        $region22: #{_deep_mlp_forward_padded.1} parent=11 // pred_check_branch
          %226 = sbr.rel (%p224) target = $region24
        $region23: #{_deep_mlp_forward_padded.1} parent=11 // pred_region
          %s228 = ssub.s32 1024, 1024
          %229 = vsyncadd [#allocation5], %s228
          %s230 = sshll.u32 [#allocation4], 4
          %s231 = int_to_ptr.vmem [resolvable:$true] %s230
          %236 = dma.hbm_to_vmem [thread:$0]  %s3, 1024, %s231, [#allocation5], 64, 64, 4
        $region24: #{_deep_mlp_forward_padded.1} parent=11 // pred_fallthru
          _
        // Predicated region
        $region25: #{_deep_mlp_forward_padded.1} parent=11 // pred_check
          %p237 = pneg %p125
        $region26: #{_deep_mlp_forward_padded.1} parent=11 // pred_check_branch
          %239 = sbr.rel (%p237) target = $region28
        $region27: #{_deep_mlp_forward_padded.1} parent=11 // pred_region
          _
        $region28: #{_deep_mlp_forward_padded.1} parent=11 // pred_fallthru
          _
        // Predicated region
        $region29: #{_deep_mlp_forward_padded.1} parent=11 // pred_check
          %p240 = pneg %p146
        $region30: #{_deep_mlp_forward_padded.1} parent=11 // pred_check_branch
          %242 = sbr.rel (%p240) target = $region32
        $region31: #{_deep_mlp_forward_padded.1} parent=11 // pred_region
          %s244 = ssub.s32 1024, 1024
          %245 = vsyncadd [#allocation5], %s244
          %s246 = sshll.u32 [#allocation6], 4
          %s247 = int_to_ptr.vmem [resolvable:$true] %s246
          %252 = dma.hbm_to_vmem [thread:$0]  %s5, 1024, %s247, [#allocation5], 64, 64, 4
        $region32: #{_deep_mlp_forward_padded.1} parent=11 // pred_fallthru
          _
        // Predicated region
        $region33: #{_deep_mlp_forward_padded.1} parent=11 // pred_check
          %p253 = pneg %p167
        $region34: #{_deep_mlp_forward_padded.1} parent=11 // pred_check_branch
          %255 = sbr.rel (%p253) target = $region36
        $region35: #{_deep_mlp_forward_padded.1} parent=11 // pred_region
          _
        $region36: #{_deep_mlp_forward_padded.1} parent=11 // pred_fallthru
          _
      $region12: #{_deep_mlp_forward_padded.1} parent=5 // pred_fallthru
        _
      %p256 = scmp.lt.s32.totalorder %s15, 2
      // Predicated region
      $region37: #{_deep_mlp_forward_padded.1} parent=5 // pred_check
        %p257 = pneg %p256
      $region38: #{_deep_mlp_forward_padded.1} parent=5 // pred_check_branch
        %259 = sbr.rel (%p257) target = $region40
      $region39: #{_deep_mlp_forward_padded.1} parent=5 // pred_region
        // Predicated region
        $region41: #{_deep_mlp_forward_padded.1} parent=39 // pred_check
          %p260 = pneg %p35
        $region42: #{_deep_mlp_forward_padded.1} parent=39 // pred_check_branch
          %262 = sbr.rel (%p260) target = $region44
        $region43: #{_deep_mlp_forward_padded.1} parent=39 // pred_region
          %p263 = scmp.lt.s32.totalorder %s15, 1
          %s264 = scalar_select %p263, %s15, 1
          %s265 = smul.addr %s264, 4
          %s266 = scalar_lea.vmem %s0, %s265
        $region44: #{_deep_mlp_forward_padded.1} parent=39 // pred_fallthru
          _
      $region40: #{_deep_mlp_forward_padded.1} parent=5 // pred_fallthru
        _
      %p267 = scmp.le.s32.totalorder 1, %s15
      %p268 = scmp.lt.s32.totalorder %s15, 3
      %p269 = pnand %p267, %p268
      %p270 = pneg %p269
      // Predicated region
      $region45: #{_deep_mlp_forward_padded.1} parent=5 // pred_check
        _
      $region46: #{_deep_mlp_forward_padded.1} parent=5 // pred_check_branch
        %272 = sbr.rel (%p269) target = $region48
      $region47: #{_deep_mlp_forward_padded.1} parent=5 // pred_region
        %s273 = ssub.s32 %s15, 1
        // Predicated region
        $region49: #{_deep_mlp_forward_padded.1} parent=47 // pred_check
          %p274 = pneg %p62
        $region50: #{_deep_mlp_forward_padded.1} parent=47 // pred_check_branch
          %276 = sbr.rel (%p274) target = $region52
        $region51: #{_deep_mlp_forward_padded.1} parent=47 // pred_region
          %277 = dma.done [#allocation3], 1024
        $region52: #{_deep_mlp_forward_padded.1} parent=47 // pred_fallthru
          _
        // Predicated region
        $region53: #{_deep_mlp_forward_padded.1} parent=47 // pred_check
          %p278 = pneg %p104
        $region54: #{_deep_mlp_forward_padded.1} parent=47 // pred_check_branch
          %280 = sbr.rel (%p278) target = $region56
        $region55: #{_deep_mlp_forward_padded.1} parent=47 // pred_region
          %281 = dma.done [#allocation5], 1024
        $region56: #{_deep_mlp_forward_padded.1} parent=47 // pred_fallthru
          _
        // Predicated region
        $region57: #{_deep_mlp_forward_padded.1} parent=47 // pred_check
          %p282 = pneg %p146
        $region58: #{_deep_mlp_forward_padded.1} parent=47 // pred_check_branch
          %284 = sbr.rel (%p282) target = $region60
        $region59: #{_deep_mlp_forward_padded.1} parent=47 // pred_region
          %285 = dma.done [#allocation5], 1024
        $region60: #{_deep_mlp_forward_padded.1} parent=47 // pred_fallthru
          _
        %p286 = scmp.lt.s32.totalorder %s20, 1
        %s287 = scalar_select %p286, %s20, 1
        %s288 = smul.addr %s287, 4
        %s289 = scalar_lea.vmem %s0, %s288
        %p290 = pneg %p41
        %p291 = pneg %p38
        %p292 = pneg %p62
        %p293 = pneg %p59
        %p294 = pneg %p83
        %p295 = pneg %p80
        %p296 = pneg %p104
        %p297 = pneg %p101
        %p298 = pneg %p125
        %p299 = pneg %p122
        %p300 = pneg %p146
        %p301 = pneg %p143
        %p302 = pneg %p167
        %p303 = pneg %p164
        %p304 = pneg %p193
        %p305 = pneg %p190
        %p306 = scmp.lt.s32.totalorder %s20, 1
        %s307 = scalar_select %p306, %s20, 1
        %s308 = smul.addr %s307, 8
        %s309 = scalar_lea.vmem %s7, %s308
        %p310 = scmp.lt.s32.totalorder %s20, 1
        %s311 = scalar_select %p310, %s20, 1
        %s312 = smul.addr %s311, 4
        %s313 = scalar_lea.vmem %s0, %s312
        %p314 = scmp.lt.s32.totalorder %s20, 1
        %s315 = scalar_select %p314, %s20, 1
        %s316 = smul.addr %s315, 8
        %s317 = scalar_lea.vmem %s7, %s316
        %v319 = vld [vmem:[%s313] sm:$0xf]
        %v320 = vld [vmem:[#allocation2] sm:$0xf]
        %v321 = vld [vmem:[#allocation2 + $0x4] sm:$0xf]
        %v322 = vld [vmem:[#allocation2 + $0x8] sm:$0xf]
        %v323 = vld [vmem:[#allocation2 + $0xc] sm:$0xf]
        %v324 = vld [vmem:[#allocation2 + $0x10] sm:$0xf]
        %v325 = vld [vmem:[#allocation2 + $0x14] sm:$0xf]
        %v326 = vld [vmem:[#allocation2 + $0x18] sm:$0xf]
        %v327 = vld [vmem:[#allocation2 + $0x1c] sm:$0xf]
        %v328 = vld [vmem:[#allocation2 + $0x20] sm:$0xf]
        %v329 = vld [vmem:[#allocation2 + $0x24] sm:$0xf]
        %v330 = vld [vmem:[#allocation2 + $0x28] sm:$0xf]
        %v331 = vld [vmem:[#allocation2 + $0x2c] sm:$0xf]
        %v332 = vld [vmem:[#allocation2 + $0x30] sm:$0xf]
        %v333 = vld [vmem:[#allocation2 + $0x34] sm:$0xf]
        %v334 = vld [vmem:[#allocation2 + $0x38] sm:$0xf]
        %v335 = vld [vmem:[#allocation2 + $0x3c] sm:$0xf]
        %v336 = vld [vmem:[%s2] sm:$0x1]
        %v338 = vlaneseq
        %v339 = vshrl.u32 %v338, 7
        %v340 = vsub.s32 0, %v339
        %v341 = vrot.slane %v336, %v340
        %v359 = vunpack.c.l.b16 %v320
        %v360 = vunpack.c.l.b16 %v321
        %v361 = vunpack.c.l.b16 %v322
        %v362 = vunpack.c.l.b16 %v323
        %v363 = vunpack.c.l.b16 %v324
        %v364 = vunpack.c.l.b16 %v325
        %v365 = vunpack.c.l.b16 %v326
        %v366 = vunpack.c.l.b16 %v327
        %v367 = vunpack.c.l.b16 %v328
        %v368 = vunpack.c.l.b16 %v329
        %v369 = vunpack.c.l.b16 %v330
        %v370 = vunpack.c.l.b16 %v331
        %v371 = vunpack.c.l.b16 %v332
        %v372 = vunpack.c.l.b16 %v333
        %v373 = vunpack.c.l.b16 %v334
        %v374 = vunpack.c.l.b16 %v335
        %v375 = vpack.c.b16 %v360, %v359
        %v376 = vpack.c.b16 %v362, %v361
        %v377 = vpack.c.b16 %v364, %v363
        %v378 = vpack.c.b16 %v366, %v365
        %v379 = vpack.c.b16 %v368, %v367
        %v380 = vpack.c.b16 %v370, %v369
        %v381 = vpack.c.b16 %v372, %v371
        %v382 = vpack.c.b16 %v374, %v373
        %391 = vmatprep.subr.bf16.mxu0 0
        %392 = vmatpush1.bf16.msra.mxu0 %v382
        %393 = vmatprep.subr.bf16.mxu0 0
        %394 = vmatpush1.bf16.msra.mxu0 %v381
        %395 = vmatprep.subr.bf16.mxu0 0
        %396 = vmatpush1.bf16.msra.mxu0 %v380
        %397 = vmatprep.subr.bf16.mxu0 0
        %398 = vmatpush1.bf16.msra.mxu0 %v379
        %399 = vmatprep.subr.bf16.mxu0 0
        %400 = vmatpush1.bf16.msra.mxu0 %v378
        %401 = vmatprep.subr.bf16.mxu0 0
        %402 = vmatpush1.bf16.msra.mxu0 %v377
        %403 = vmatprep.subr.bf16.mxu0 0
        %404 = vmatpush1.bf16.msra.mxu0 %v376
        %405 = vmatprep.subr.bf16.mxu0 0
        %406 = vmatpush1.bf16.msra.mxu0 %v375
        %407 = vmatprep.subr.bf16.mxu0 0
        %408 = vmatpush2.bf16.msra.mxu0 0
        %409 = vmatprep.subr.bf16.mxu0 0
        %410 = vmatpush2.bf16.msra.mxu0 0
        %411 = vmatprep.subr.bf16.mxu0 0
        %412 = vmatpush2.bf16.msra.mxu0 0
        %413 = vmatprep.subr.bf16.mxu0 0
        %414 = vmatpush2.bf16.msra.mxu0 0
        %415 = vmatprep.subr.bf16.mxu0 0
        %416 = vmatpush2.bf16.msra.mxu0 0
        %417 = vmatprep.subr.bf16.mxu0 0
        %418 = vmatpush2.bf16.msra.mxu0 0
        %419 = vmatprep.subr.bf16.mxu0 0
        %420 = vmatpush2.bf16.msra.mxu0 0
        %421 = vmatprep.subr.bf16.mxu0 0
        %422 = vmatpush2.bf16.msra.mxu0 0
        %423 = vmatprep.mubr.bf16.mxu0 0
        %424 = vmatmul.mubr.bf16.gmra.mxu0 %v319
        %v425 = vpop.f32.mrf.mxu0
        %v426 = vadd.f32 %v341, %v425
        %v427 = vpop.f32.mrf.mxu0
        %v428 = vpop.f32.mrf.mxu0
        %v429 = vpop.f32.mrf.mxu0
        %430 = vdwg.mxu0
        %v431 = vmax.f32 %v426, 0.0
        %v432 = vpack.c.bf16 %v431, %v431
        %v433 = vld [vmem:[#allocation4] sm:$0xf]
        %v434 = vld [vmem:[#allocation4 + $0x4] sm:$0xf]
        %v435 = vld [vmem:[#allocation4 + $0x8] sm:$0xf]
        %v436 = vld [vmem:[#allocation4 + $0xc] sm:$0xf]
        %v437 = vld [vmem:[#allocation4 + $0x10] sm:$0xf]
        %v438 = vld [vmem:[#allocation4 + $0x14] sm:$0xf]
        %v439 = vld [vmem:[#allocation4 + $0x18] sm:$0xf]
        %v440 = vld [vmem:[#allocation4 + $0x1c] sm:$0xf]
        %v441 = vld [vmem:[#allocation4 + $0x20] sm:$0xf]
        %v442 = vld [vmem:[#allocation4 + $0x24] sm:$0xf]
        %v443 = vld [vmem:[#allocation4 + $0x28] sm:$0xf]
        %v444 = vld [vmem:[#allocation4 + $0x2c] sm:$0xf]
        %v445 = vld [vmem:[#allocation4 + $0x30] sm:$0xf]
        %v446 = vld [vmem:[#allocation4 + $0x34] sm:$0xf]
        %v447 = vld [vmem:[#allocation4 + $0x38] sm:$0xf]
        %v448 = vld [vmem:[#allocation4 + $0x3c] sm:$0xf]
        %v449 = vld [vmem:[%s4] sm:$0x1]
        %v451 = vlaneseq
        %v452 = vshrl.u32 %v451, 7
        %v453 = vsub.s32 0, %v452
        %v454 = vrot.slane %v449, %v453
        %v472 = vunpack.c.l.b16 %v433
        %v473 = vunpack.c.l.b16 %v434
        %v474 = vunpack.c.l.b16 %v435
        %v475 = vunpack.c.l.b16 %v436
        %v476 = vunpack.c.l.b16 %v437
        %v477 = vunpack.c.l.b16 %v438
        %v478 = vunpack.c.l.b16 %v439
        %v479 = vunpack.c.l.b16 %v440
        %v480 = vunpack.c.l.b16 %v441
        %v481 = vunpack.c.l.b16 %v442
        %v482 = vunpack.c.l.b16 %v443
        %v483 = vunpack.c.l.b16 %v444
        %v484 = vunpack.c.l.b16 %v445
        %v485 = vunpack.c.l.b16 %v446
        %v486 = vunpack.c.l.b16 %v447
        %v487 = vunpack.c.l.b16 %v448
        %v488 = vpack.c.b16 %v473, %v472
        %v489 = vpack.c.b16 %v475, %v474
        %v490 = vpack.c.b16 %v477, %v476
        %v491 = vpack.c.b16 %v479, %v478
        %v492 = vpack.c.b16 %v481, %v480
        %v493 = vpack.c.b16 %v483, %v482
        %v494 = vpack.c.b16 %v485, %v484
        %v495 = vpack.c.b16 %v487, %v486
        %504 = vmatprep.subr.bf16.mxu0 0
        %505 = vmatpush1.bf16.msra.mxu0 %v495
        %506 = vmatprep.subr.bf16.mxu0 0
        %507 = vmatpush1.bf16.msra.mxu0 %v494
        %508 = vmatprep.subr.bf16.mxu0 0
        %509 = vmatpush1.bf16.msra.mxu0 %v493
        %510 = vmatprep.subr.bf16.mxu0 0
        %511 = vmatpush1.bf16.msra.mxu0 %v492
        %512 = vmatprep.subr.bf16.mxu0 0
        %513 = vmatpush1.bf16.msra.mxu0 %v491
        %514 = vmatprep.subr.bf16.mxu0 0
        %515 = vmatpush1.bf16.msra.mxu0 %v490
        %516 = vmatprep.subr.bf16.mxu0 0
        %517 = vmatpush1.bf16.msra.mxu0 %v489
        %518 = vmatprep.subr.bf16.mxu0 0
        %519 = vmatpush1.bf16.msra.mxu0 %v488
        %520 = vmatprep.subr.bf16.mxu0 0
        %521 = vmatpush2.bf16.msra.mxu0 0
        %522 = vmatprep.subr.bf16.mxu0 0
        %523 = vmatpush2.bf16.msra.mxu0 0
        %524 = vmatprep.subr.bf16.mxu0 0
        %525 = vmatpush2.bf16.msra.mxu0 0
        %526 = vmatprep.subr.bf16.mxu0 0
        %527 = vmatpush2.bf16.msra.mxu0 0
        %528 = vmatprep.subr.bf16.mxu0 0
        %529 = vmatpush2.bf16.msra.mxu0 0
        %530 = vmatprep.subr.bf16.mxu0 0
        %531 = vmatpush2.bf16.msra.mxu0 0
        %532 = vmatprep.subr.bf16.mxu0 0
        %533 = vmatpush2.bf16.msra.mxu0 0
        %534 = vmatprep.subr.bf16.mxu0 0
        %535 = vmatpush2.bf16.msra.mxu0 0
        %536 = vmatprep.mubr.bf16.mxu0 0
        %537 = vmatmul.mubr.bf16.gmra.mxu0 %v432
        %v538 = vpop.f32.mrf.mxu0
        %v539 = vadd.f32 %v454, %v538
        %v540 = vpop.f32.mrf.mxu0
        %v541 = vpop.f32.mrf.mxu0
        %v542 = vpop.f32.mrf.mxu0
        %543 = vdwg.mxu0
        %v544 = vmax.f32 %v539, 0.0
        %v545 = vpack.c.bf16 %v544, %v544
        %v546 = vld [vmem:[#allocation6] sm:$0xf]
        %v547 = vld [vmem:[#allocation6 + $0x4] sm:$0xf]
        %v548 = vld [vmem:[#allocation6 + $0x8] sm:$0xf]
        %v549 = vld [vmem:[#allocation6 + $0xc] sm:$0xf]
        %v550 = vld [vmem:[#allocation6 + $0x10] sm:$0xf]
        %v551 = vld [vmem:[#allocation6 + $0x14] sm:$0xf]
        %v552 = vld [vmem:[#allocation6 + $0x18] sm:$0xf]
        %v553 = vld [vmem:[#allocation6 + $0x1c] sm:$0xf]
        %v554 = vld [vmem:[#allocation6 + $0x20] sm:$0xf]
        %v555 = vld [vmem:[#allocation6 + $0x24] sm:$0xf]
        %v556 = vld [vmem:[#allocation6 + $0x28] sm:$0xf]
        %v557 = vld [vmem:[#allocation6 + $0x2c] sm:$0xf]
        %v558 = vld [vmem:[#allocation6 + $0x30] sm:$0xf]
        %v559 = vld [vmem:[#allocation6 + $0x34] sm:$0xf]
        %v560 = vld [vmem:[#allocation6 + $0x38] sm:$0xf]
        %v561 = vld [vmem:[#allocation6 + $0x3c] sm:$0xf]
        %v562 = vld [vmem:[%s6] sm:$0x1]
        %v564 = vlaneseq
        %v565 = vshrl.u32 %v564, 7
        %v566 = vsub.s32 0, %v565
        %v567 = vrot.slane %v562, %v566
        %v585 = vunpack.c.l.b16 %v546
        %v586 = vunpack.c.l.b16 %v547
        %v587 = vunpack.c.l.b16 %v548
        %v588 = vunpack.c.l.b16 %v549
        %v589 = vunpack.c.l.b16 %v550
        %v590 = vunpack.c.l.b16 %v551
        %v591 = vunpack.c.l.b16 %v552
        %v592 = vunpack.c.l.b16 %v553
        %v593 = vunpack.c.l.b16 %v554
        %v594 = vunpack.c.l.b16 %v555
        %v595 = vunpack.c.l.b16 %v556
        %v596 = vunpack.c.l.b16 %v557
        %v597 = vunpack.c.l.b16 %v558
        %v598 = vunpack.c.l.b16 %v559
        %v599 = vunpack.c.l.b16 %v560
        %v600 = vunpack.c.l.b16 %v561
        %v601 = vpack.c.b16 %v586, %v585
        %v602 = vpack.c.b16 %v588, %v587
        %v603 = vpack.c.b16 %v590, %v589
        %v604 = vpack.c.b16 %v592, %v591
        %v605 = vpack.c.b16 %v594, %v593
        %v606 = vpack.c.b16 %v596, %v595
        %v607 = vpack.c.b16 %v598, %v597
        %v608 = vpack.c.b16 %v600, %v599
        %617 = vmatprep.subr.bf16.mxu0 0
        %618 = vmatpush1.bf16.msra.mxu0 %v608
        %619 = vmatprep.subr.bf16.mxu0 0
        %620 = vmatpush1.bf16.msra.mxu0 %v607
        %621 = vmatprep.subr.bf16.mxu0 0
        %622 = vmatpush1.bf16.msra.mxu0 %v606
        %623 = vmatprep.subr.bf16.mxu0 0
        %624 = vmatpush1.bf16.msra.mxu0 %v605
        %625 = vmatprep.subr.bf16.mxu0 0
        %626 = vmatpush1.bf16.msra.mxu0 %v604
        %627 = vmatprep.subr.bf16.mxu0 0
        %628 = vmatpush1.bf16.msra.mxu0 %v603
        %629 = vmatprep.subr.bf16.mxu0 0
        %630 = vmatpush1.bf16.msra.mxu0 %v602
        %631 = vmatprep.subr.bf16.mxu0 0
        %632 = vmatpush1.bf16.msra.mxu0 %v601
        %633 = vmatprep.subr.bf16.mxu0 0
        %634 = vmatpush2.bf16.msra.mxu0 0
        %635 = vmatprep.subr.bf16.mxu0 0
        %636 = vmatpush2.bf16.msra.mxu0 0
        %637 = vmatprep.subr.bf16.mxu0 0
        %638 = vmatpush2.bf16.msra.mxu0 0
        %639 = vmatprep.subr.bf16.mxu0 0
        %640 = vmatpush2.bf16.msra.mxu0 0
        %641 = vmatprep.subr.bf16.mxu0 0
        %642 = vmatpush2.bf16.msra.mxu0 0
        %643 = vmatprep.subr.bf16.mxu0 0
        %644 = vmatpush2.bf16.msra.mxu0 0
        %645 = vmatprep.subr.bf16.mxu0 0
        %646 = vmatpush2.bf16.msra.mxu0 0
        %647 = vmatprep.subr.bf16.mxu0 0
        %648 = vmatpush2.bf16.msra.mxu0 0
        %649 = vmatprep.mubr.bf16.mxu0 0
        %650 = vmatmul.mubr.bf16.gmra.mxu0 %v545
        %v651 = vpop.f32.mrf.mxu0
        %v652 = vadd.f32 %v567, %v651
        %v653 = vpop.f32.mrf.mxu0
        %v654 = vpop.f32.mrf.mxu0
        %v655 = vpop.f32.mrf.mxu0
        %656 = vdwg.mxu0
        %657 = vst [vmem:[%s317] sm:$0xff] %v652
        %p658 = scmp.lt.s32.totalorder %s20, 1
        %s659 = scalar_select %p658, %s20, 1
        %s660 = smul.addr %s659, 8
        %s661 = scalar_lea.vmem %s7, %s660
        // Predicated region
        $region61: #{_deep_mlp_forward_padded.1} parent=47 // pred_check
          %p662 = pneg %p190
        $region62: #{_deep_mlp_forward_padded.1} parent=47 // pred_check_branch
          %664 = sbr.rel (%p662) target = $region64
        $region63: #{_deep_mlp_forward_padded.1} parent=47 // pred_region
          _
        $region64: #{_deep_mlp_forward_padded.1} parent=47 // pred_fallthru
          _
      $region48: #{_deep_mlp_forward_padded.1} parent=5 // pred_fallthru
        _
      %p665 = scmp.le.s32.totalorder 2, %s15
      // Predicated region
      $region65: #{_deep_mlp_forward_padded.1} parent=5 // pred_check
        %p666 = pneg %p665
      $region66: #{_deep_mlp_forward_padded.1} parent=5 // pred_check_branch
        %668 = sbr.rel (%p666) target = $region68
      $region67: #{_deep_mlp_forward_padded.1} parent=5 // pred_region
        %s669 = ssub.s32 %s15, 2
        // Predicated region
        $region69: #{_deep_mlp_forward_padded.1} parent=67 // pred_check
          %p670 = pneg %p196
        $region70: #{_deep_mlp_forward_padded.1} parent=67 // pred_check_branch
          %672 = sbr.rel (%p670) target = $region72
        $region71: #{_deep_mlp_forward_padded.1} parent=67 // pred_region
          %p673 = scmp.lt.s32.totalorder %s21, 1
          %s674 = scalar_select %p673, %s21, 1
          %s675 = smul.addr %s674, 8
          %s676 = scalar_lea.vmem %s7, %s675
        $region72: #{_deep_mlp_forward_padded.1} parent=67 // pred_fallthru
          _
      $region68: #{_deep_mlp_forward_padded.1} parent=5 // pred_fallthru
        _
    $region6: #{_deep_mlp_forward_padded.1} parent=1 // loop_footer
      %s19 = sadd.s32 1, %s15
    $region7: #{_deep_mlp_forward_padded.1} parent=1 // loop_footer_branch
      %14 = sbr.rel target = $region3
    $region8: #{_deep_mlp_forward_padded.1} parent=1 // loop_exit
      _
    %677 = vsyncpa [#allocation3], 1
    %s678 = scalar_lea.sflag [#allocation3], 1
    %679 = vsyncpa %s678, 1
    %680 = vsyncpa [#allocation5], 1

</llo_original>
